<compile_context>
chip_gen: v7x
topology: tpu7x:2x2x1
jax: 0.10.0
libtpu: 0.0.40
codegen_flags: <defaults>
</compile_context>

<pallas_src>
import jax
import jax.numpy as jnp
from jax.experimental import pallas as pl
from jax.experimental.pallas import tpu as pltpu

LANE = 128
SMOOTH = 1e-5


def _sublane_tile(dtype):
    # sublane granularity of the (sub, 128) VMEM tile for this dtype
    return {1: 32, 2: 16, 4: 8}[jnp.dtype(dtype).itemsize]


def _make_dice_kernel(n_classes):
    def _dice_partial_kernel(score_ref, label_ref, inter_ref, y_ref, z_ref):
        # score_ref : (C, Rc, 128)  scores for ALL classes, one chunk
        # label_ref : (1, Rc, 128)  int labels (padding = -1)
        # inter/y/z : (1, C, 128)   f32 lane-wise partial sums (resident
        #                           output accumulators across the chunk axis)
        k = pl.program_id(1)

        @pl.when(k == 0)
        def _():
            inter_ref[...] = jnp.zeros_like(inter_ref)
            y_ref[...] = jnp.zeros_like(y_ref)
            z_ref[...] = jnp.zeros_like(z_ref)

        lab = label_ref[0].astype(jnp.int32)            # (Rc, 128)
        for i in range(n_classes):                      # static, small C
            s_i = score_ref[i].astype(jnp.float32)      # (Rc, 128)
            m = lab == i                                # one-hot of class i
            inter_ref[0, i, :] += jnp.sum(jnp.where(m, s_i, 0.0), axis=0)
            # one-hot is 0/1 -> sum(t*t) == sum(t); no extra multiply needed
            y_ref[0, i, :] += jnp.sum(jnp.where(m, 1.0, 0.0), axis=0)
            z_ref[0, i, :] += jnp.sum(s_i * s_i, axis=0)

    return _dice_partial_kernel


def dice_loss(inputs, target, n_classes, weight=None, softmax=False,
              chunk_rows=1024, num_shards=2, score_dtype=jnp.float32):
    """Pallas implementation of DiceLoss.forward (mask=None path).

    score_dtype=jnp.bfloat16 halves the dominant HBM stream when softmax=True
    (accumulation stays f32 inside the kernel); default f32 matches the
    PyTorch reference bit-for-bit in reduction precision.
    """
    # TODO(synk): the optional `mask` path (_dice_mask_loss) is not implemented.
    B, C, H, W = inputs.shape
    assert C == n_classes, "predict & target shape do not match"

    if softmax:
        inputs = jax.nn.softmax(inputs, axis=1)

    N = B * H * W
    label_dtype = jnp.int8 if n_classes < 127 else jnp.int32

    # One fused chain of transpose / cast / reshape so XLA emits a single copy
    # pass producing the class-major layout the kernel streams.
    scores = jnp.transpose(inputs, (1, 0, 2, 3)).astype(score_dtype).reshape(C, N)
    labels = target.astype(label_dtype).reshape(N)

    sub = max(_sublane_tile(score_dtype), _sublane_tile(label_dtype))
    rows = pl.cdiv(N, LANE)
    rows_aligned = pl.cdiv(rows, sub) * sub

    # Big streaming tiles, but cap the scores double-buffer at ~8 MiB so the
    # working set stays far below the scoped-VMEM limit on every generation
    # (v7x has only 64 MiB VMEM / 32 MiB default scoped).
    score_bytes_per_row = C * LANE * jnp.dtype(score_dtype).itemsize
    max_chunk = max(sub, ((8 << 20) // (2 * score_bytes_per_row)) // sub * sub)
    chunk_rows = max(sub, min(chunk_rows, max_chunk, rows_aligned))
    chunk_rows = pl.cdiv(chunk_rows, sub) * sub

    total_chunks = pl.cdiv(rows_aligned, chunk_rows)
    num_shards = max(1, min(num_shards, total_chunks))
    chunks_per_shard = pl.cdiv(total_chunks, num_shards)
    R = num_shards * chunks_per_shard * chunk_rows
    n_pad = R * LANE - N

    scores = jnp.pad(scores, ((0, 0), (0, n_pad))).reshape(C, R, LANE)
    labels = jnp.pad(labels, ((0, n_pad),), constant_values=-1).reshape(1, R, LANE)

    def in_map(p, k):
        return (0, p * chunks_per_shard + k, 0)

    def out_map(p, k):
        return (p, 0, 0)

    out_sds = jax.ShapeDtypeStruct((num_shards, C, LANE), jnp.float32)
    inter_p, y_p, z_p = pl.pallas_call(
        _make_dice_kernel(n_classes),
        out_shape=(out_sds, out_sds, out_sds),
        grid_spec=pltpu.PrefetchScalarGridSpec(
            num_scalar_prefetch=0,
            grid=(num_shards, chunks_per_shard),
            in_specs=[
                pl.BlockSpec((C, chunk_rows, LANE), in_map),
                pl.BlockSpec((1, chunk_rows, LANE), in_map),
            ],
            out_specs=(
                pl.BlockSpec((1, C, LANE), out_map),
                pl.BlockSpec((1, C, LANE), out_map),
                pl.BlockSpec((1, C, LANE), out_map),
            ),
        ),
        compiler_params=pltpu.CompilerParams(
            dimension_semantics=("parallel", "arbitrary")),
    )(scores, labels)

    # Tiny final reductions / dice division in JAX glue.
    intersect = jnp.sum(inter_p, axis=(0, 2))            # (C,)
    y_sum = jnp.sum(y_p, axis=(0, 2))
    z_sum = jnp.sum(z_p, axis=(0, 2))
    dice = (2.0 * intersect + SMOOTH) / (z_sum + y_sum + SMOOTH)
    per_class_loss = 1.0 - dice

    if weight is None:
        weight = jnp.ones((n_classes,), jnp.float32)
    else:
        weight = jnp.asarray(weight, jnp.float32)
    return jnp.sum(per_class_loss * weight) / n_classes


if __name__ == "__main__":
    key = jax.random.PRNGKey(0)
    B, C, H, W = 2, 4, 16, 16
    k1, k2 = jax.random.split(key)
    logits = jax.random.normal(k1, (B, C, H, W), dtype=jnp.float32)
    target = jax.random.randint(k2, (B, 1, H, W), 0, C)

    loss = dice_loss(logits, target, n_classes=C, softmax=True)
    loss = jax.block_until_ready(loss)

    # Pure-JAX reference mirroring the PyTorch module (mask=None, weight=None).
    probs = jax.nn.softmax(logits, axis=1)
    one_hot = jnp.concatenate(
        [(target == i).astype(jnp.float32) for i in range(C)], axis=1)
    ref = 0.0
    for i in range(C):
        s = probs[:, i]
        t = one_hot[:, i]
        inter = jnp.sum(s * t)
        y_sum = jnp.sum(t * t)
        z_sum = jnp.sum(s * s)
        ref += 1.0 - (2.0 * inter + SMOOTH) / (z_sum + y_sum + SMOOTH)
    ref = ref / C

    assert jnp.allclose(loss, ref, rtol=1e-5, atol=1e-5), (loss, ref)
    print("KERNEL_OK")
</pallas_src>

<mosaic_0001>
module attributes {stable_mosaic.version = 11 : i64} {
  func.func @_dice_partial_kernel(%arg0: i32, %arg1: i32, %arg2: memref<4x32x128xf32, #tpu.memory_space<vmem>>, %arg3: memref<1x32x128xi8, #tpu.memory_space<vmem>>, %arg4: memref<1x4x128xf32, #tpu.memory_space<vmem>>, %arg5: memref<1x4x128xf32, #tpu.memory_space<vmem>>, %arg6: memref<1x4x128xf32, #tpu.memory_space<vmem>>) attributes {dimension_semantics = [#tpu.dimension_semantics<parallel>, #tpu.dimension_semantics<arbitrary>], iteration_bounds = array<i64: 1, 1>, scalar_prefetch = 0 : i64, scratch_operands = 0 : i64, tpu.core_type = #tpu.core_type<tc>, window_params = [{transform_indices = @transform_0, window_bounds = array<i64: 4, 32, 128>}, {transform_indices = @transform_1, window_bounds = array<i64: 1, 32, 128>}, {transform_indices = @transform_2, window_bounds = array<i64: 1, 4, 128>}, {transform_indices = @transform_3, window_bounds = array<i64: 1, 4, 128>}, {transform_indices = @transform_4, window_bounds = array<i64: 1, 4, 128>}]} {
    %c0_i32 = arith.constant 0 : i32
    %0 = arith.cmpi eq, %arg1, %c0_i32 : i32
    %1 = arith.extui %0 : i1 to i32
    %c0_i32_0 = arith.constant 0 : i32
    %2 = arith.cmpi ne, %1, %c0_i32_0 : i32
    scf.if %2 {
      %cst_108 = arith.constant 0.000000e+00 : f32
      %130 = vector.broadcast %cst_108 : f32 to vector<1x4x128xf32>
      %c0_109 = arith.constant 0 : index
      %c0_110 = arith.constant 0 : index
      %c0_111 = arith.constant 0 : index
      %131 = vector.load %arg4[%c0_109, %c0_110, %c0_111] : memref<1x4x128xf32, #tpu.memory_space<vmem>>, vector<1x4x128xf32>
      tpu.vector_store %arg4[%c0_109, %c0_110, %c0_111], %130 {strides = array<i32>} : memref<1x4x128xf32, #tpu.memory_space<vmem>>, vector<1x4x128xf32>,
      %cst_112 = arith.constant 0.000000e+00 : f32
      %132 = vector.broadcast %cst_112 : f32 to vector<1x4x128xf32>
      %c0_113 = arith.constant 0 : index
      %c0_114 = arith.constant 0 : index
      %c0_115 = arith.constant 0 : index
      %133 = vector.load %arg5[%c0_113, %c0_114, %c0_115] : memref<1x4x128xf32, #tpu.memory_space<vmem>>, vector<1x4x128xf32>
      tpu.vector_store %arg5[%c0_113, %c0_114, %c0_115], %132 {strides = array<i32>} : memref<1x4x128xf32, #tpu.memory_space<vmem>>, vector<1x4x128xf32>,
      %cst_116 = arith.constant 0.000000e+00 : f32
      %134 = vector.broadcast %cst_116 : f32 to vector<1x4x128xf32>
      %c0_117 = arith.constant 0 : index
      %c0_118 = arith.constant 0 : index
      %c0_119 = arith.constant 0 : index
      %135 = vector.load %arg6[%c0_117, %c0_118, %c0_119] : memref<1x4x128xf32, #tpu.memory_space<vmem>>, vector<1x4x128xf32>
      tpu.vector_store %arg6[%c0_117, %c0_118, %c0_119], %134 {strides = array<i32>} : memref<1x4x128xf32, #tpu.memory_space<vmem>>, vector<1x4x128xf32>,
    } else {
    }
    %c0 = arith.constant 0 : index
    %c0_1 = arith.constant 0 : index
    %c0_2 = arith.constant 0 : index
    %3 = vector.load %arg3[%c0, %c0_1, %c0_2] : memref<1x32x128xi8, #tpu.memory_space<vmem>>, vector<1x32x128xi8>
    %4 = vector.shape_cast %3 : vector<1x32x128xi8> to vector<32x128xi8>
    %5 = arith.extsi %4 : vector<32x128xi8> to vector<32x128xi32>
    %c0_3 = arith.constant 0 : index
    %c0_4 = arith.constant 0 : index
    %c0_5 = arith.constant 0 : index
    %6 = vector.load %arg2[%c0_3, %c0_4, %c0_5] : memref<4x32x128xf32, #tpu.memory_space<vmem>>, vector<1x32x128xf32>
    %7 = vector.shape_cast %6 : vector<1x32x128xf32> to vector<32x128xf32>
    %c0_i32_6 = arith.constant 0 : i32
    %8 = vector.broadcast %c0_i32_6 : i32 to vector<32x128xi32>
    %9 = arith.cmpi eq, %5, %8 : vector<32x128xi32>
    %c0_7 = arith.constant 0 : index
    %c0_8 = arith.constant 0 : index
    %c0_9 = arith.constant 0 : index
    %10 = vector.load %arg4[%c0_7, %c0_8, %c0_9] : memref<1x4x128xf32, #tpu.memory_space<vmem>>, vector<1x1x128xf32>
    %11 = vector.shape_cast %10 : vector<1x1x128xf32> to vector<128xf32>
    %cst = arith.constant 0.000000e+00 : f32
    %12 = vector.broadcast %cst : f32 to vector<32x128xf32>
    %13 = arith.select %9, %7, %12 : vector<32x128xi1>, vector<32x128xf32>
    %cst_10 = arith.constant dense<0.000000e+00> : vector<128xf32>
    %14 = vector.multi_reduction <add>, %13, %cst_10 [0] : vector<32x128xf32> to vector<128xf32>
    %15 = arith.addf %11, %14 : vector<128xf32>
    %c0_11 = arith.constant 0 : index
    %c0_12 = arith.constant 0 : index
    %c0_13 = arith.constant 0 : index
    %16 = vector.load %arg4[%c0_11, %c0_12, %c0_13] : memref<1x4x128xf32, #tpu.memory_space<vmem>>, vector<1x1x128xf32>
    %17 = vector.shape_cast %16 : vector<1x1x128xf32> to vector<128xf32>
    %18 = vector.shape_cast %15 : vector<128xf32> to vector<1x1x128xf32>
    tpu.vector_store %arg4[%c0_11, %c0_12, %c0_13], %18 {strides = array<i32>} : memref<1x4x128xf32, #tpu.memory_space<vmem>>, vector<1x1x128xf32>,
    %c0_14 = arith.constant 0 : index
    %c0_15 = arith.constant 0 : index
    %c0_16 = arith.constant 0 : index
    %19 = vector.load %arg5[%c0_14, %c0_15, %c0_16] : memref<1x4x128xf32, #tpu.memory_space<vmem>>, vector<1x1x128xf32>
    %20 = vector.shape_cast %19 : vector<1x1x128xf32> to vector<128xf32>
    %cst_17 = arith.constant 1.000000e+00 : f32
    %cst_18 = arith.constant 0.000000e+00 : f32
    %21 = vector.broadcast %cst_17 : f32 to vector<32x128xf32>
    %22 = vector.broadcast %cst_18 : f32 to vector<32x128xf32>
    %23 = arith.select %9, %21, %22 : vector<32x128xi1>, vector<32x128xf32>
    %cst_19 = arith.constant dense<0.000000e+00> : vector<128xf32>
    %24 = vector.multi_reduction <add>, %23, %cst_19 [0] : vector<32x128xf32> to vector<128xf32>
    %25 = arith.addf %20, %24 : vector<128xf32>
    %c0_20 = arith.constant 0 : index
    %c0_21 = arith.constant 0 : index
    %c0_22 = arith.constant 0 : index
    %26 = vector.load %arg5[%c0_20, %c0_21, %c0_22] : memref<1x4x128xf32, #tpu.memory_space<vmem>>, vector<1x1x128xf32>
    %27 = vector.shape_cast %26 : vector<1x1x128xf32> to vector<128xf32>
    %28 = vector.shape_cast %25 : vector<128xf32> to vector<1x1x128xf32>
    tpu.vector_store %arg5[%c0_20, %c0_21, %c0_22], %28 {strides = array<i32>} : memref<1x4x128xf32, #tpu.memory_space<vmem>>, vector<1x1x128xf32>,
    %c0_23 = arith.constant 0 : index
    %c0_24 = arith.constant 0 : index
    %c0_25 = arith.constant 0 : index
    %29 = vector.load %arg6[%c0_23, %c0_24, %c0_25] : memref<1x4x128xf32, #tpu.memory_space<vmem>>, vector<1x1x128xf32>
    %30 = vector.shape_cast %29 : vector<1x1x128xf32> to vector<128xf32>
    %31 = arith.mulf %7, %7 : vector<32x128xf32>
    %cst_26 = arith.constant dense<0.000000e+00> : vector<128xf32>
    %32 = vector.multi_reduction <add>, %31, %cst_26 [0] : vector<32x128xf32> to vector<128xf32>
    %33 = arith.addf %30, %32 : vector<128xf32>
    %c0_27 = arith.constant 0 : index
    %c0_28 = arith.constant 0 : index
    %c0_29 = arith.constant 0 : index
    %34 = vector.load %arg6[%c0_27, %c0_28, %c0_29] : memref<1x4x128xf32, #tpu.memory_space<vmem>>, vector<1x1x128xf32>
    %35 = vector.shape_cast %34 : vector<1x1x128xf32> to vector<128xf32>
    %36 = vector.shape_cast %33 : vector<128xf32> to vector<1x1x128xf32>
    tpu.vector_store %arg6[%c0_27, %c0_28, %c0_29], %36 {strides = array<i32>} : memref<1x4x128xf32, #tpu.memory_space<vmem>>, vector<1x1x128xf32>,
    %c1 = arith.constant 1 : index
    %c0_30 = arith.constant 0 : index
    %c0_31 = arith.constant 0 : index
    %37 = vector.load %arg2[%c1, %c0_30, %c0_31] : memref<4x32x128xf32, #tpu.memory_space<vmem>>, vector<1x32x128xf32>
    %38 = vector.shape_cast %37 : vector<1x32x128xf32> to vector<32x128xf32>
    %c1_i32 = arith.constant 1 : i32
    %39 = vector.broadcast %c1_i32 : i32 to vector<32x128xi32>
    %40 = arith.cmpi eq, %5, %39 : vector<32x128xi32>
    %c0_32 = arith.constant 0 : index
    %c1_33 = arith.constant 1 : index
    %c0_34 = arith.constant 0 : index
    %41 = vector.load %arg4[%c0_32, %c1_33, %c0_34] : memref<1x4x128xf32, #tpu.memory_space<vmem>>, vector<1x1x128xf32>
    %42 = vector.shape_cast %41 : vector<1x1x128xf32> to vector<128xf32>
    %cst_35 = arith.constant 0.000000e+00 : f32
    %43 = vector.broadcast %cst_35 : f32 to vector<32x128xf32>
    %44 = arith.select %40, %38, %43 : vector<32x128xi1>, vector<32x128xf32>
    %cst_36 = arith.constant dense<0.000000e+00> : vector<128xf32>
    %45 = vector.multi_reduction <add>, %44, %cst_36 [0] : vector<32x128xf32> to vector<128xf32>
    %46 = arith.addf %42, %45 : vector<128xf32>
    %c0_37 = arith.constant 0 : index
    %c1_38 = arith.constant 1 : index
    %c0_39 = arith.constant 0 : index
    %47 = vector.load %arg4[%c0_37, %c1_38, %c0_39] : memref<1x4x128xf32, #tpu.memory_space<vmem>>, vector<1x1x128xf32>
    %48 = vector.shape_cast %47 : vector<1x1x128xf32> to vector<128xf32>
    %49 = vector.shape_cast %46 : vector<128xf32> to vector<1x1x128xf32>
    tpu.vector_store %arg4[%c0_37, %c1_38, %c0_39], %49 {strides = array<i32>} : memref<1x4x128xf32, #tpu.memory_space<vmem>>, vector<1x1x128xf32>,
    %c0_40 = arith.constant 0 : index
    %c1_41 = arith.constant 1 : index
    %c0_42 = arith.constant 0 : index
    %50 = vector.load %arg5[%c0_40, %c1_41, %c0_42] : memref<1x4x128xf32, #tpu.memory_space<vmem>>, vector<1x1x128xf32>
    %51 = vector.shape_cast %50 : vector<1x1x128xf32> to vector<128xf32>
    %cst_43 = arith.constant 1.000000e+00 : f32
    %cst_44 = arith.constant 0.000000e+00 : f32
    %52 = vector.broadcast %cst_43 : f32 to vector<32x128xf32>
    %53 = vector.broadcast %cst_44 : f32 to vector<32x128xf32>
    %54 = arith.select %40, %52, %53 : vector<32x128xi1>, vector<32x128xf32>
    %cst_45 = arith.constant dense<0.000000e+00> : vector<128xf32>
    %55 = vector.multi_reduction <add>, %54, %cst_45 [0] : vector<32x128xf32> to vector<128xf32>
    %56 = arith.addf %51, %55 : vector<128xf32>
    %c0_46 = arith.constant 0 : index
    %c1_47 = arith.constant 1 : index
    %c0_48 = arith.constant 0 : index
    %57 = vector.load %arg5[%c0_46, %c1_47, %c0_48] : memref<1x4x128xf32, #tpu.memory_space<vmem>>, vector<1x1x128xf32>
    %58 = vector.shape_cast %57 : vector<1x1x128xf32> to vector<128xf32>
    %59 = vector.shape_cast %56 : vector<128xf32> to vector<1x1x128xf32>
    tpu.vector_store %arg5[%c0_46, %c1_47, %c0_48], %59 {strides = array<i32>} : memref<1x4x128xf32, #tpu.memory_space<vmem>>, vector<1x1x128xf32>,
    %c0_49 = arith.constant 0 : index
    %c1_50 = arith.constant 1 : index
    %c0_51 = arith.constant 0 : index
    %60 = vector.load %arg6[%c0_49, %c1_50, %c0_51] : memref<1x4x128xf32, #tpu.memory_space<vmem>>, vector<1x1x128xf32>
    %61 = vector.shape_cast %60 : vector<1x1x128xf32> to vector<128xf32>
    %62 = arith.mulf %38, %38 : vector<32x128xf32>
    %cst_52 = arith.constant dense<0.000000e+00> : vector<128xf32>
    %63 = vector.multi_reduction <add>, %62, %cst_52 [0] : vector<32x128xf32> to vector<128xf32>
    %64 = arith.addf %61, %63 : vector<128xf32>
    %c0_53 = arith.constant 0 : index
    %c1_54 = arith.constant 1 : index
    %c0_55 = arith.constant 0 : index
    %65 = vector.load %arg6[%c0_53, %c1_54, %c0_55] : memref<1x4x128xf32, #tpu.memory_space<vmem>>, vector<1x1x128xf32>
    %66 = vector.shape_cast %65 : vector<1x1x128xf32> to vector<128xf32>
    %67 = vector.shape_cast %64 : vector<128xf32> to vector<1x1x128xf32>
    tpu.vector_store %arg6[%c0_53, %c1_54, %c0_55], %67 {strides = array<i32>} : memref<1x4x128xf32, #tpu.memory_space<vmem>>, vector<1x1x128xf32>,
    %c2 = arith.constant 2 : index
    %c0_56 = arith.constant 0 : index
    %c0_57 = arith.constant 0 : index
    %68 = vector.load %arg2[%c2, %c0_56, %c0_57] : memref<4x32x128xf32, #tpu.memory_space<vmem>>, vector<1x32x128xf32>
    %69 = vector.shape_cast %68 : vector<1x32x128xf32> to vector<32x128xf32>
    %c2_i32 = arith.constant 2 : i32
    %70 = vector.broadcast %c2_i32 : i32 to vector<32x128xi32>
    %71 = arith.cmpi eq, %5, %70 : vector<32x128xi32>
    %c0_58 = arith.constant 0 : index
    %c2_59 = arith.constant 2 : index
    %c0_60 = arith.constant 0 : index
    %72 = vector.load %arg4[%c0_58, %c2_59, %c0_60] : memref<1x4x128xf32, #tpu.memory_space<vmem>>, vector<1x1x128xf32>
    %73 = vector.shape_cast %72 : vector<1x1x128xf32> to vector<128xf32>
    %cst_61 = arith.constant 0.000000e+00 : f32
    %74 = vector.broadcast %cst_61 : f32 to vector<32x128xf32>
    %75 = arith.select %71, %69, %74 : vector<32x128xi1>, vector<32x128xf32>
    %cst_62 = arith.constant dense<0.000000e+00> : vector<128xf32>
    %76 = vector.multi_reduction <add>, %75, %cst_62 [0] : vector<32x128xf32> to vector<128xf32>
    %77 = arith.addf %73, %76 : vector<128xf32>
    %c0_63 = arith.constant 0 : index
    %c2_64 = arith.constant 2 : index
    %c0_65 = arith.constant 0 : index
    %78 = vector.load %arg4[%c0_63, %c2_64, %c0_65] : memref<1x4x128xf32, #tpu.memory_space<vmem>>, vector<1x1x128xf32>
    %79 = vector.shape_cast %78 : vector<1x1x128xf32> to vector<128xf32>
    %80 = vector.shape_cast %77 : vector<128xf32> to vector<1x1x128xf32>
    tpu.vector_store %arg4[%c0_63, %c2_64, %c0_65], %80 {strides = array<i32>} : memref<1x4x128xf32, #tpu.memory_space<vmem>>, vector<1x1x128xf32>,
    %c0_66 = arith.constant 0 : index
    %c2_67 = arith.constant 2 : index
    %c0_68 = arith.constant 0 : index
    %81 = vector.load %arg5[%c0_66, %c2_67, %c0_68] : memref<1x4x128xf32, #tpu.memory_space<vmem>>, vector<1x1x128xf32>
    %82 = vector.shape_cast %81 : vector<1x1x128xf32> to vector<128xf32>
    %cst_69 = arith.constant 1.000000e+00 : f32
    %cst_70 = arith.constant 0.000000e+00 : f32
    %83 = vector.broadcast %cst_69 : f32 to vector<32x128xf32>
    %84 = vector.broadcast %cst_70 : f32 to vector<32x128xf32>
    %85 = arith.select %71, %83, %84 : vector<32x128xi1>, vector<32x128xf32>
    %cst_71 = arith.constant dense<0.000000e+00> : vector<128xf32>
    %86 = vector.multi_reduction <add>, %85, %cst_71 [0] : vector<32x128xf32> to vector<128xf32>
    %87 = arith.addf %82, %86 : vector<128xf32>
    %c0_72 = arith.constant 0 : index
    %c2_73 = arith.constant 2 : index
    %c0_74 = arith.constant 0 : index
    %88 = vector.load %arg5[%c0_72, %c2_73, %c0_74] : memref<1x4x128xf32, #tpu.memory_space<vmem>>, vector<1x1x128xf32>
    %89 = vector.shape_cast %88 : vector<1x1x128xf32> to vector<128xf32>
    %90 = vector.shape_cast %87 : vector<128xf32> to vector<1x1x128xf32>
    tpu.vector_store %arg5[%c0_72, %c2_73, %c0_74], %90 {strides = array<i32>} : memref<1x4x128xf32, #tpu.memory_space<vmem>>, vector<1x1x128xf32>,
    %c0_75 = arith.constant 0 : index
    %c2_76 = arith.constant 2 : index
    %c0_77 = arith.constant 0 : index
    %91 = vector.load %arg6[%c0_75, %c2_76, %c0_77] : memref<1x4x128xf32, #tpu.memory_space<vmem>>, vector<1x1x128xf32>
    %92 = vector.shape_cast %91 : vector<1x1x128xf32> to vector<128xf32>
    %93 = arith.mulf %69, %69 : vector<32x128xf32>
    %cst_78 = arith.constant dense<0.000000e+00> : vector<128xf32>
    %94 = vector.multi_reduction <add>, %93, %cst_78 [0] : vector<32x128xf32> to vector<128xf32>
    %95 = arith.addf %92, %94 : vector<128xf32>
    %c0_79 = arith.constant 0 : index
    %c2_80 = arith.constant 2 : index
    %c0_81 = arith.constant 0 : index
    %96 = vector.load %arg6[%c0_79, %c2_80, %c0_81] : memref<1x4x128xf32, #tpu.memory_space<vmem>>, vector<1x1x128xf32>
    %97 = vector.shape_cast %96 : vector<1x1x128xf32> to vector<128xf32>
    %98 = vector.shape_cast %95 : vector<128xf32> to vector<1x1x128xf32>
    tpu.vector_store %arg6[%c0_79, %c2_80, %c0_81], %98 {strides = array<i32>} : memref<1x4x128xf32, #tpu.memory_space<vmem>>, vector<1x1x128xf32>,
    %c3 = arith.constant 3 : index
    %c0_82 = arith.constant 0 : index
    %c0_83 = arith.constant 0 : index
    %99 = vector.load %arg2[%c3, %c0_82, %c0_83] : memref<4x32x128xf32, #tpu.memory_space<vmem>>, vector<1x32x128xf32>
    %100 = vector.shape_cast %99 : vector<1x32x128xf32> to vector<32x128xf32>
    %c3_i32 = arith.constant 3 : i32
    %101 = vector.broadcast %c3_i32 : i32 to vector<32x128xi32>
    %102 = arith.cmpi eq, %5, %101 : vector<32x128xi32>
    %c0_84 = arith.constant 0 : index
    %c3_85 = arith.constant 3 : index
    %c0_86 = arith.constant 0 : index
    %103 = vector.load %arg4[%c0_84, %c3_85, %c0_86] : memref<1x4x128xf32, #tpu.memory_space<vmem>>, vector<1x1x128xf32>
    %104 = vector.shape_cast %103 : vector<1x1x128xf32> to vector<128xf32>
    %cst_87 = arith.constant 0.000000e+00 : f32
    %105 = vector.broadcast %cst_87 : f32 to vector<32x128xf32>
    %106 = arith.select %102, %100, %105 : vector<32x128xi1>, vector<32x128xf32>
    %cst_88 = arith.constant dense<0.000000e+00> : vector<128xf32>
    %107 = vector.multi_reduction <add>, %106, %cst_88 [0] : vector<32x128xf32> to vector<128xf32>
    %108 = arith.addf %104, %107 : vector<128xf32>
    %c0_89 = arith.constant 0 : index
    %c3_90 = arith.constant 3 : index
    %c0_91 = arith.constant 0 : index
    %109 = vector.load %arg4[%c0_89, %c3_90, %c0_91] : memref<1x4x128xf32, #tpu.memory_space<vmem>>, vector<1x1x128xf32>
    %110 = vector.shape_cast %109 : vector<1x1x128xf32> to vector<128xf32>
    %111 = vector.shape_cast %108 : vector<128xf32> to vector<1x1x128xf32>
    tpu.vector_store %arg4[%c0_89, %c3_90, %c0_91], %111 {strides = array<i32>} : memref<1x4x128xf32, #tpu.memory_space<vmem>>, vector<1x1x128xf32>,
    %c0_92 = arith.constant 0 : index
    %c3_93 = arith.constant 3 : index
    %c0_94 = arith.constant 0 : index
    %112 = vector.load %arg5[%c0_92, %c3_93, %c0_94] : memref<1x4x128xf32, #tpu.memory_space<vmem>>, vector<1x1x128xf32>
    %113 = vector.shape_cast %112 : vector<1x1x128xf32> to vector<128xf32>
    %cst_95 = arith.constant 1.000000e+00 : f32
    %cst_96 = arith.constant 0.000000e+00 : f32
    %114 = vector.broadcast %cst_95 : f32 to vector<32x128xf32>
    %115 = vector.broadcast %cst_96 : f32 to vector<32x128xf32>
    %116 = arith.select %102, %114, %115 : vector<32x128xi1>, vector<32x128xf32>
    %cst_97 = arith.constant dense<0.000000e+00> : vector<128xf32>
    %117 = vector.multi_reduction <add>, %116, %cst_97 [0] : vector<32x128xf32> to vector<128xf32>
    %118 = arith.addf %113, %117 : vector<128xf32>
    %c0_98 = arith.constant 0 : index
    %c3_99 = arith.constant 3 : index
    %c0_100 = arith.constant 0 : index
    %119 = vector.load %arg5[%c0_98, %c3_99, %c0_100] : memref<1x4x128xf32, #tpu.memory_space<vmem>>, vector<1x1x128xf32>
    %120 = vector.shape_cast %119 : vector<1x1x128xf32> to vector<128xf32>
    %121 = vector.shape_cast %118 : vector<128xf32> to vector<1x1x128xf32>
    tpu.vector_store %arg5[%c0_98, %c3_99, %c0_100], %121 {strides = array<i32>} : memref<1x4x128xf32, #tpu.memory_space<vmem>>, vector<1x1x128xf32>,
    %c0_101 = arith.constant 0 : index
    %c3_102 = arith.constant 3 : index
    %c0_103 = arith.constant 0 : index
    %122 = vector.load %arg6[%c0_101, %c3_102, %c0_103] : memref<1x4x128xf32, #tpu.memory_space<vmem>>, vector<1x1x128xf32>
    %123 = vector.shape_cast %122 : vector<1x1x128xf32> to vector<128xf32>
    %124 = arith.mulf %100, %100 : vector<32x128xf32>
    %cst_104 = arith.constant dense<0.000000e+00> : vector<128xf32>
    %125 = vector.multi_reduction <add>, %124, %cst_104 [0] : vector<32x128xf32> to vector<128xf32>
    %126 = arith.addf %123, %125 : vector<128xf32>
    %c0_105 = arith.constant 0 : index
    %c3_106 = arith.constant 3 : index
    %c0_107 = arith.constant 0 : index
    %127 = vector.load %arg6[%c0_105, %c3_106, %c0_107] : memref<1x4x128xf32, #tpu.memory_space<vmem>>, vector<1x1x128xf32>
    %128 = vector.shape_cast %127 : vector<1x1x128xf32> to vector<128xf32>
    %129 = vector.shape_cast %126 : vector<128xf32> to vector<1x1x128xf32>
    tpu.vector_store %arg6[%c0_105, %c3_106, %c0_107], %129 {strides = array<i32>} : memref<1x4x128xf32, #tpu.memory_space<vmem>>, vector<1x1x128xf32>,
    return
  }
  func.func @transform_0(%arg0: i32, %arg1: i32) -> (i32, i32, i32) {
    %c1_i32 = arith.constant 1 : i32
    %0 = arith.muli %arg0, %c1_i32 : i32
    %1 = arith.addi %0, %arg1 : i32
    %c0_i32 = arith.constant 0 : i32
    %c0_i32_0 = arith.constant 0 : i32
    %c0_i32_1 = arith.constant 0 : i32
    return %c0_i32, %1, %c0_i32_0 : i32, i32, i32
  }
  func.func @transform_1(%arg0: i32, %arg1: i32) -> (i32, i32, i32) {
    %c1_i32 = arith.constant 1 : i32
    %0 = arith.muli %arg0, %c1_i32 : i32
    %1 = arith.addi %0, %arg1 : i32
    %c0_i32 = arith.constant 0 : i32
    %c0_i32_0 = arith.constant 0 : i32
    %c0_i32_1 = arith.constant 0 : i32
    return %c0_i32, %1, %c0_i32_0 : i32, i32, i32
  }
  func.func @transform_2(%arg0: i32, %arg1: i32) -> (i32, i32, i32) {
    %c0_i32 = arith.constant 0 : i32
    %c0_i32_0 = arith.constant 0 : i32
    %c0_i32_1 = arith.constant 0 : i32
    return %arg0, %c0_i32, %c0_i32_0 : i32, i32, i32
  }
  func.func @transform_3(%arg0: i32, %arg1: i32) -> (i32, i32, i32) {
    %c0_i32 = arith.constant 0 : i32
    %c0_i32_0 = arith.constant 0 : i32
    %c0_i32_1 = arith.constant 0 : i32
    return %arg0, %c0_i32, %c0_i32_0 : i32, i32, i32
  }
  func.func @transform_4(%arg0: i32, %arg1: i32) -> (i32, i32, i32) {
    %c0_i32 = arith.constant 0 : i32
    %c0_i32_0 = arith.constant 0 : i32
    %c0_i32_1 = arith.constant 0 : i32
    return %arg0, %c0_i32, %c0_i32_0 : i32, i32, i32
  }
}

</mosaic_0001>

<llo_original>
// kernel: tpu_custom_call.1
$region0: #{tpu_custom_call.1}
  #allocation0 [shape = 'u32[]', space=smem, size = 0x4, offset = 0x4, fixed_abs, tag = 'smem constant byte address 0x4 - core index']
  #allocation1 [shape = 'u32[144,128]{1,0:T(1,128)}', space=vmem, size = 0x12000, scoped, tag = 'internal scratch']
  %s0 = inlined_call_operand.hbm [shape: f32[4,32,128], index: 0, kind: input, shape index: {}]
  %s1 = inlined_call_operand.hbm [shape: s8[1,32,128], index: 1, kind: input, shape index: {}]
  %s2 = inlined_call_operand.hbm [shape: f32[1,4,128], index: 2, kind: output, shape index: {0}]
  %s3 = inlined_call_operand.hbm [shape: f32[1,4,128], index: 3, kind: output, shape index: {1}]
  %s4 = inlined_call_operand.hbm [shape: f32[1,4,128], index: 4, kind: output, shape index: {2}]
  %5 = xla_tuple %s2, %s3, %s4
  %s6 = sld [smem:[#allocation0]]
  $region46: #{tpu_custom_call.1} parent=0
    _
  %s8 = ssub.s32 1, %s6
  %s9 = scalar_select 0, %s8, %s6
  $region1: #{tpu_custom_call.1} parent=0
    #allocation2 [shape = 'u8[65536]{0}', space=vmem, size = 0x10000, scoped, tag = 'input window, operand 0, single buffered']
    #allocation3 [shape = 's32[1]{0}', space=sflag, size = 0x4, scoped, tag = 'scoped memory for tpu_custom_call.1']
    #allocation4 [shape = 's32[1]{0}', space=sflag, size = 0x4, scoped, tag = 'scoped memory for tpu_custom_call.1']
    #allocation5 [shape = 'u8[4096]{0}', space=vmem, size = 0x1000, scoped, tag = 'input window, operand 1, single buffered']
    #allocation6 [shape = 's32[1]{0}', space=sflag, size = 0x4, scoped, tag = 'scoped memory for tpu_custom_call.1']
    #allocation7 [shape = 'u8[2048]{0}', space=vmem, size = 0x800, scoped, tag = 'output window, operand 0, single buffered']
    #allocation8 [shape = 'u8[2048]{0}', space=vmem, size = 0x800, scoped, tag = 'output window, operand 1, single buffered']
    #allocation9 [shape = 's32[1]{0}', space=sflag, size = 0x4, scoped, tag = 'scoped memory for tpu_custom_call.1']
    #allocation10 [shape = 'u8[2048]{0}', space=vmem, size = 0x800, scoped, tag = 'output window, operand 2, single buffered']
    %10 = vsyncpa [#allocation3], 0
    %11 = vsyncpa [#allocation6], 0
    %12 = vsyncpa [#allocation4], 0
    %13 = vsyncpa [#allocation9], 0
    // Predicated region
    $region2: #{tpu_custom_call.1} parent=1 // pred_check
      _
    $region3: #{tpu_custom_call.1} parent=1 // pred_check_branch
      %15 = sbr.rel (0) target = $region5
    $region4: #{tpu_custom_call.1} parent=1 // pred_region
      %s16 = sadd.s32 0, 0
      %s17 = smul.u32 4, %s16
      %s19 = ssub.s32 2048, 2048
      %20 = vsyncadd [#allocation3], %s19
      %s21 = smul.addr %s17, 128
      %s22 = scalar_lea.hbm %s0, %s21
      %s23 = sshll.u32 [#allocation2], 4
      %s24 = int_to_ptr.vmem [resolvable:$true] %s23
      %29 = dma.hbm_to_vmem [thread:$0]  %s22, 2048, %s24, [#allocation3], 128, 128, 8
    $region5: #{tpu_custom_call.1} parent=1 // pred_fallthru
      _
    // Predicated region
    $region6: #{tpu_custom_call.1} parent=1 // pred_check
      _
    $region7: #{tpu_custom_call.1} parent=1 // pred_check_branch
      %31 = sbr.rel (0) target = $region9
    $region8: #{tpu_custom_call.1} parent=1 // pred_region
      %s32 = sadd.s32 0, 0
      %s34 = ssub.s32 128, 128
      %35 = vsyncadd [#allocation6], %s34
      %s36 = smul.addr %s32, 128
      %s37 = scalar_lea.hbm %s1, %s36
      %s39 = sshll.u32 [#allocation5], 4
      %s40 = int_to_ptr.vmem [resolvable:$true] %s39
      %42 = dma.hbm_to_vmem [thread:$0]  %s37, 128, %s40, [#allocation6]
    $region9: #{tpu_custom_call.1} parent=1 // pred_fallthru
      _
    // Predicated region
    $region10: #{tpu_custom_call.1} parent=1 // pred_check
      _
    $region11: #{tpu_custom_call.1} parent=1 // pred_check_branch
      %44 = sbr.rel (0) target = $region13
    $region12: #{tpu_custom_call.1} parent=1 // pred_region
      %45 = dma.done [#allocation3], 2048
    $region13: #{tpu_custom_call.1} parent=1 // pred_fallthru
      _
    // Predicated region
    $region14: #{tpu_custom_call.1} parent=1 // pred_check
      _
    $region15: #{tpu_custom_call.1} parent=1 // pred_check_branch
      %47 = sbr.rel (0) target = $region17
    $region16: #{tpu_custom_call.1} parent=1 // pred_region
      %48 = dma.done [#allocation6], 128
    $region17: #{tpu_custom_call.1} parent=1 // pred_fallthru
      _
    %s49 = sadd.s32 0, 0
    %s50 = smul.u32 4, %s49
    %s51 = sadd.s32 0, 0
    %p52 = scmp.eq.s32.totalorder 0, 0
    // Predicated region
    $region18: #{tpu_custom_call.1} parent=1 // pred_check
      %p53 = pneg %p52
    $region19: #{tpu_custom_call.1} parent=1 // pred_check_branch
      %55 = sbr.rel (%p53) target = $region21
    $region20: #{tpu_custom_call.1} parent=1 // pred_region
      %56 = vst [vmem:[#allocation7] sm:$0xf] 0.0
      %57 = vst [vmem:[#allocation8] sm:$0xf] 0.0
      %58 = vst [vmem:[#allocation10] sm:$0xf] 0.0
    $region21: #{tpu_custom_call.1} parent=1 // pred_fallthru
      _
    %v59 = vld [vmem:[#allocation5] sm:$0xff]
    %v60 = vunpack.c.0.s8 %v59
    %v61 = vunpack.c.1.s8 %v59
    %v62 = vunpack.c.2.s8 %v59
    %v63 = vunpack.c.3.s8 %v59
    %v64 = vld [vmem:[#allocation2] sm:$0xff]
    %v65 = vld [vmem:[#allocation2 + $0x8] sm:$0xff]
    %v66 = vld [vmem:[#allocation2 + $0x10] sm:$0xff]
    %v67 = vld [vmem:[#allocation2 + $0x18] sm:$0xff]
    %vm68 = vcmp.eq.s32.totalorder %v60, 0
    %vm69 = vcmp.eq.s32.totalorder %v61, 0
    %vm70 = vcmp.eq.s32.totalorder %v62, 0
    %vm71 = vcmp.eq.s32.totalorder %v63, 0
    %v72 = vld [vmem:[#allocation7] sm:$0x1]
    %v73 = vsel %vm68, %v64, 0.0
    %v74 = vsel %vm69, %v65, 0.0
    %v75 = vsel %vm70, %v66, 0.0
    %v76 = vsel %vm71, %v67, 0.0
    %v77 = vadd.f32 %v73, %v74
    %v78 = vadd.f32 %v77, %v75
    %v79 = vadd.f32 %v78, %v76
    %v80 = vrot.slane %v79, 4
    %v81 = vadd.f32 %v79, %v80
    %v82 = vrot.slane %v81, 2
    %v83 = vadd.f32 %v81, %v82
    %v84 = vrot.slane %v83, 1
    %v85 = vadd.f32 %v83, %v84
    %v86 = vadd.f32 %v72, %v85
    %87 = vst [vmem:[#allocation7] sm:$0x1] %v86
    %v88 = vld [vmem:[#allocation8] sm:$0x1]
    %v89 = vsel %vm68, 1.0, 0.0
    %v90 = vsel %vm69, 1.0, 0.0
    %v91 = vsel %vm70, 1.0, 0.0
    %v92 = vsel %vm71, 1.0, 0.0
    %v93 = vadd.f32 %v89, %v90
    %v94 = vadd.f32 %v93, %v91
    %v95 = vadd.f32 %v94, %v92
    %v96 = vrot.slane %v95, 4
    %v97 = vadd.f32 %v95, %v96
    %v98 = vrot.slane %v97, 2
    %v99 = vadd.f32 %v97, %v98
    %v100 = vrot.slane %v99, 1
    %v101 = vadd.f32 %v99, %v100
    %v102 = vadd.f32 %v88, %v101
    %103 = vst [vmem:[#allocation8] sm:$0x1] %v102
    %v104 = vld [vmem:[#allocation10] sm:$0x1]
    %v105 = vmul.f32 %v64, %v64
    %v106 = vmul.f32 %v65, %v65
    %v107 = vmul.f32 %v66, %v66
    %v108 = vmul.f32 %v67, %v67
    %v109 = vadd.f32 %v105, %v106
    %v110 = vadd.f32 %v109, %v107
    %v111 = vadd.f32 %v110, %v108
    %v112 = vrot.slane %v111, 4
    %v113 = vadd.f32 %v111, %v112
    %v114 = vrot.slane %v113, 2
    %v115 = vadd.f32 %v113, %v114
    %v116 = vrot.slane %v115, 1
    %v117 = vadd.f32 %v115, %v116
    %v118 = vadd.f32 %v104, %v117
    %119 = vst [vmem:[#allocation10] sm:$0x1] %v118
    %s120 = scalar_lea.vmem [#allocation2], 32
    %v121 = vld [vmem:[%s120] sm:$0xff]
    %v122 = vld [vmem:[%s120 + $0x8] sm:$0xff]
    %v123 = vld [vmem:[%s120 + $0x10] sm:$0xff]
    %v124 = vld [vmem:[%s120 + $0x18] sm:$0xff]
    %vm125 = vcmp.eq.s32.totalorder %v60, 1
    %vm126 = vcmp.eq.s32.totalorder %v61, 1
    %vm127 = vcmp.eq.s32.totalorder %v62, 1
    %vm128 = vcmp.eq.s32.totalorder %v63, 1
    %v129 = vld [vmem:[#allocation7 + $0x1] sm:$0x1]
    %v130 = vsel %vm125, %v121, 0.0
    %v131 = vsel %vm126, %v122, 0.0
    %v132 = vsel %vm127, %v123, 0.0
    %v133 = vsel %vm128, %v124, 0.0
    %v134 = vadd.f32 %v130, %v131
    %v135 = vadd.f32 %v134, %v132
    %v136 = vadd.f32 %v135, %v133
    %v137 = vrot.slane %v136, 4
    %v138 = vadd.f32 %v136, %v137
    %v139 = vrot.slane %v138, 2
    %v140 = vadd.f32 %v138, %v139
    %v141 = vrot.slane %v140, 1
    %v142 = vadd.f32 %v140, %v141
    %v143 = vadd.f32 %v129, %v142
    %144 = vst [vmem:[#allocation7 + $0x1] sm:$0x1] %v143
    %v145 = vld [vmem:[#allocation8 + $0x1] sm:$0x1]
    %v146 = vsel %vm125, 1.0, 0.0
    %v147 = vsel %vm126, 1.0, 0.0
    %v148 = vsel %vm127, 1.0, 0.0
    %v149 = vsel %vm128, 1.0, 0.0
    %v150 = vadd.f32 %v146, %v147
    %v151 = vadd.f32 %v150, %v148
    %v152 = vadd.f32 %v151, %v149
    %v153 = vrot.slane %v152, 4
    %v154 = vadd.f32 %v152, %v153
    %v155 = vrot.slane %v154, 2
    %v156 = vadd.f32 %v154, %v155
    %v157 = vrot.slane %v156, 1
    %v158 = vadd.f32 %v156, %v157
    %v159 = vadd.f32 %v145, %v158
    %160 = vst [vmem:[#allocation8 + $0x1] sm:$0x1] %v159
    %v161 = vld [vmem:[#allocation10 + $0x1] sm:$0x1]
    %v162 = vmul.f32 %v121, %v121
    %v163 = vmul.f32 %v122, %v122
    %v164 = vmul.f32 %v123, %v123
    %v165 = vmul.f32 %v124, %v124
    %v166 = vadd.f32 %v162, %v163
    %v167 = vadd.f32 %v166, %v164
    %v168 = vadd.f32 %v167, %v165
    %v169 = vrot.slane %v168, 4
    %v170 = vadd.f32 %v168, %v169
    %v171 = vrot.slane %v170, 2
    %v172 = vadd.f32 %v170, %v171
    %v173 = vrot.slane %v172, 1
    %v174 = vadd.f32 %v172, %v173
    %v175 = vadd.f32 %v161, %v174
    %176 = vst [vmem:[#allocation10 + $0x1] sm:$0x1] %v175
    %s177 = scalar_lea.vmem [#allocation2], 64
    %v178 = vld [vmem:[%s177] sm:$0xff]
    %v179 = vld [vmem:[%s177 + $0x8] sm:$0xff]
    %v180 = vld [vmem:[%s177 + $0x10] sm:$0xff]
    %v181 = vld [vmem:[%s177 + $0x18] sm:$0xff]
    %vm182 = vcmp.eq.s32.totalorder %v60, 2
    %vm183 = vcmp.eq.s32.totalorder %v61, 2
    %vm184 = vcmp.eq.s32.totalorder %v62, 2
    %vm185 = vcmp.eq.s32.totalorder %v63, 2
    %v186 = vld [vmem:[#allocation7 + $0x2] sm:$0x1]
    %v187 = vsel %vm182, %v178, 0.0
    %v188 = vsel %vm183, %v179, 0.0
    %v189 = vsel %vm184, %v180, 0.0
    %v190 = vsel %vm185, %v181, 0.0
    %v191 = vadd.f32 %v187, %v188
    %v192 = vadd.f32 %v191, %v189
    %v193 = vadd.f32 %v192, %v190
    %v194 = vrot.slane %v193, 4
    %v195 = vadd.f32 %v193, %v194
    %v196 = vrot.slane %v195, 2
    %v197 = vadd.f32 %v195, %v196
    %v198 = vrot.slane %v197, 1
    %v199 = vadd.f32 %v197, %v198
    %v200 = vadd.f32 %v186, %v199
    %201 = vst [vmem:[#allocation7 + $0x2] sm:$0x1] %v200
    %v202 = vld [vmem:[#allocation8 + $0x2] sm:$0x1]
    %v203 = vsel %vm182, 1.0, 0.0
    %v204 = vsel %vm183, 1.0, 0.0
    %v205 = vsel %vm184, 1.0, 0.0
    %v206 = vsel %vm185, 1.0, 0.0
    %v207 = vadd.f32 %v203, %v204
    %v208 = vadd.f32 %v207, %v205
    %v209 = vadd.f32 %v208, %v206
    %v210 = vrot.slane %v209, 4
    %v211 = vadd.f32 %v209, %v210
    %v212 = vrot.slane %v211, 2
    %v213 = vadd.f32 %v211, %v212
    %v214 = vrot.slane %v213, 1
    %v215 = vadd.f32 %v213, %v214
    %v216 = vadd.f32 %v202, %v215
    %217 = vst [vmem:[#allocation8 + $0x2] sm:$0x1] %v216
    %v218 = vld [vmem:[#allocation10 + $0x2] sm:$0x1]
    %v219 = vmul.f32 %v178, %v178
    %v220 = vmul.f32 %v179, %v179
    %v221 = vmul.f32 %v180, %v180
    %v222 = vmul.f32 %v181, %v181
    %v223 = vadd.f32 %v219, %v220
    %v224 = vadd.f32 %v223, %v221
    %v225 = vadd.f32 %v224, %v222
    %v226 = vrot.slane %v225, 4
    %v227 = vadd.f32 %v225, %v226
    %v228 = vrot.slane %v227, 2
    %v229 = vadd.f32 %v227, %v228
    %v230 = vrot.slane %v229, 1
    %v231 = vadd.f32 %v229, %v230
    %v232 = vadd.f32 %v218, %v231
    %233 = vst [vmem:[#allocation10 + $0x2] sm:$0x1] %v232
    %s234 = scalar_lea.vmem [#allocation2], 96
    %v235 = vld [vmem:[%s234] sm:$0xff]
    %v236 = vld [vmem:[%s234 + $0x8] sm:$0xff]
    %v237 = vld [vmem:[%s234 + $0x10] sm:$0xff]
    %v238 = vld [vmem:[%s234 + $0x18] sm:$0xff]
    %vm239 = vcmp.eq.s32.totalorder %v60, 3
    %vm240 = vcmp.eq.s32.totalorder %v61, 3
    %vm241 = vcmp.eq.s32.totalorder %v62, 3
    %vm242 = vcmp.eq.s32.totalorder %v63, 3
    %v243 = vld [vmem:[#allocation7 + $0x3] sm:$0x1]
    %v244 = vsel %vm239, %v235, 0.0
    %v245 = vsel %vm240, %v236, 0.0
    %v246 = vsel %vm241, %v237, 0.0
    %v247 = vsel %vm242, %v238, 0.0
    %v248 = vadd.f32 %v244, %v245
    %v249 = vadd.f32 %v248, %v246
    %v250 = vadd.f32 %v249, %v247
    %v251 = vrot.slane %v250, 4
    %v252 = vadd.f32 %v250, %v251
    %v253 = vrot.slane %v252, 2
    %v254 = vadd.f32 %v252, %v253
    %v255 = vrot.slane %v254, 1
    %v256 = vadd.f32 %v254, %v255
    %v257 = vadd.f32 %v243, %v256
    %258 = vst [vmem:[#allocation7 + $0x3] sm:$0x1] %v257
    %v259 = vld [vmem:[#allocation8 + $0x3] sm:$0x1]
    %v260 = vsel %vm239, 1.0, 0.0
    %v261 = vsel %vm240, 1.0, 0.0
    %v262 = vsel %vm241, 1.0, 0.0
    %v263 = vsel %vm242, 1.0, 0.0
    %v264 = vadd.f32 %v260, %v261
    %v265 = vadd.f32 %v264, %v262
    %v266 = vadd.f32 %v265, %v263
    %v267 = vrot.slane %v266, 4
    %v268 = vadd.f32 %v266, %v267
    %v269 = vrot.slane %v268, 2
    %v270 = vadd.f32 %v268, %v269
    %v271 = vrot.slane %v270, 1
    %v272 = vadd.f32 %v270, %v271
    %v273 = vadd.f32 %v259, %v272
    %274 = vst [vmem:[#allocation8 + $0x3] sm:$0x1] %v273
    %v275 = vld [vmem:[#allocation10 + $0x3] sm:$0x1]
    %v276 = vmul.f32 %v235, %v235
    %v277 = vmul.f32 %v236, %v236
    %v278 = vmul.f32 %v237, %v237
    %v279 = vmul.f32 %v238, %v238
    %v280 = vadd.f32 %v276, %v277
    %v281 = vadd.f32 %v280, %v278
    %v282 = vadd.f32 %v281, %v279
    %v283 = vrot.slane %v282, 4
    %v284 = vadd.f32 %v282, %v283
    %v285 = vrot.slane %v284, 2
    %v286 = vadd.f32 %v284, %v285
    %v287 = vrot.slane %v286, 1
    %v288 = vadd.f32 %v286, %v287
    %v289 = vadd.f32 %v275, %v288
    %290 = vst [vmem:[#allocation10 + $0x3] sm:$0x1] %v289
    // Predicated region
    $region22: #{tpu_custom_call.1} parent=1 // pred_check
      _
    $region23: #{tpu_custom_call.1} parent=1 // pred_check_branch
      %292 = sbr.rel (0) target = $region25
    $region24: #{tpu_custom_call.1} parent=1 // pred_region
      %s294 = ssub.s32 64, 64
      %295 = vsyncadd [#allocation4], %s294
      %s297 = sshll.u32 [#allocation7], 4
      %s298 = int_to_ptr.vmem [resolvable:$true] %s297
      %300 = dma.vmem_to_hbm [thread:$0]  %s298, 64, %s2, [#allocation4]
    $region25: #{tpu_custom_call.1} parent=1 // pred_fallthru
      _
    // Predicated region
    $region26: #{tpu_custom_call.1} parent=1 // pred_check
      _
    $region27: #{tpu_custom_call.1} parent=1 // pred_check_branch
      %302 = sbr.rel (0) target = $region29
    $region28: #{tpu_custom_call.1} parent=1 // pred_region
      %s304 = ssub.s32 64, 64
      %305 = vsyncadd [#allocation9], %s304
      %s307 = sshll.u32 [#allocation8], 4
      %s308 = int_to_ptr.vmem [resolvable:$true] %s307
      %310 = dma.vmem_to_hbm [thread:$0]  %s308, 64, %s3, [#allocation9]
    $region29: #{tpu_custom_call.1} parent=1 // pred_fallthru
      _
    // Predicated region
    $region30: #{tpu_custom_call.1} parent=1 // pred_check
      _
    $region31: #{tpu_custom_call.1} parent=1 // pred_check_branch
      %312 = sbr.rel (0) target = $region33
    $region32: #{tpu_custom_call.1} parent=1 // pred_region
      %s314 = ssub.s32 64, 64
      %315 = vsyncadd [#allocation9], %s314
      %s317 = sshll.u32 [#allocation10], 4
      %s318 = int_to_ptr.vmem [resolvable:$true] %s317
      %320 = dma.vmem_to_hbm [thread:$0]  %s318, 64, %s4, [#allocation9]
    $region33: #{tpu_custom_call.1} parent=1 // pred_fallthru
      _
    // Predicated region
    $region34: #{tpu_custom_call.1} parent=1 // pred_check
      _
    $region35: #{tpu_custom_call.1} parent=1 // pred_check_branch
      %322 = sbr.rel (0) target = $region37
    $region36: #{tpu_custom_call.1} parent=1 // pred_region
      %323 = dma.done [#allocation4], 64
    $region37: #{tpu_custom_call.1} parent=1 // pred_fallthru
      _
    // Predicated region
    $region38: #{tpu_custom_call.1} parent=1 // pred_check
      _
    $region39: #{tpu_custom_call.1} parent=1 // pred_check_branch
      %325 = sbr.rel (0) target = $region41
    $region40: #{tpu_custom_call.1} parent=1 // pred_region
      %326 = dma.done [#allocation9], 64
    $region41: #{tpu_custom_call.1} parent=1 // pred_fallthru
      _
    // Predicated region
    $region42: #{tpu_custom_call.1} parent=1 // pred_check
      _
    $region43: #{tpu_custom_call.1} parent=1 // pred_check_branch
      %328 = sbr.rel (0) target = $region45
    $region44: #{tpu_custom_call.1} parent=1 // pred_region
      %329 = dma.done [#allocation9], 64
    $region45: #{tpu_custom_call.1} parent=1 // pred_fallthru
      _
    %330 = vsyncpa [#allocation3], 1
    %331 = vsyncpa [#allocation6], 1
    %332 = vsyncpa [#allocation4], 1
    %333 = vsyncpa [#allocation9], 1

</llo_original>
